<compile_context>
chip_gen: v6e
topology: v6e:2x2x1
jax: 0.10.0
libtpu: 0.0.40
codegen_flags: <defaults>
</compile_context>

<pallas_src>
import jax
import jax.numpy as jnp
import numpy as np
from jax.experimental import pallas as pl
from jax.experimental.pallas import tpu as pltpu


# ----------------------------------------------------------------------------
# Synthetic vocab / config (mirrors CharLinear.__init__ with emit_dims set)
# ----------------------------------------------------------------------------
WORDS = ["the", "cat", "sat", "on", "a", "mat", "dog", "runs",
         "fast", "blue", "sky", "tree", "code", "jax", "tpu", "chip"]
VSIZE = len(WORDS)                      # vocab size
EMB_DIM = 16                            # char embedding dim (emb_dim)
HIDDEN_DIM = 32                         # word embedding dim (hidden_dim)
EMIT_DIMS = [16, 32]                    # per-conv output channels -> kernels = [1, 2]
KERNEL_SIZES = list(range(1, len(EMIT_DIMS) + 1))
SUM_EMIT = sum(EMIT_DIMS)               # highway / projection input dim
NUM_HIGHWAY = 1

MAX_LEN = max(len(w) for w in WORDS) + 2        # + <bow>, <eow>
I2C = ["<cpad>", "<bow>", "<eow>"] + sorted({c for w in WORDS for c in w})
C2I = {c: i for i, c in enumerate(I2C)}
PAD_IDX = 0

KMAX = max(KERNEL_SIZES)                # window size used for the combined im2col matmul
NUM_WINDOWS = MAX_LEN                   # window positions t = 0 .. MAX_LEN-1
NEG_BIG = -1.0e30                       # finite "minus infinity" for the time/channel mask


def build_char_buffer():
    buf = np.zeros((VSIZE, MAX_LEN), dtype=np.int32)
    for i, word in enumerate(WORDS):
        procword = ["<bow>"] + list(word) + ["<eow>"]
        for t, ch in enumerate(procword):
            buf[i, t] = C2I[ch]
    return jnp.asarray(buf)


def build_conv_mask():
    # mask[t, c] = 0 if time position t is valid for channel c's conv, else NEG_BIG.
    # Conv with kernel size k is valid for t in [0, MAX_LEN - k].
    mask = np.zeros((NUM_WINDOWS, SUM_EMIT), dtype=np.float32)
    off = 0
    for k, d in zip(KERNEL_SIZES, EMIT_DIMS):
        mask[MAX_LEN - k + 1:, off:off + d] = NEG_BIG
        off += d
    return jnp.asarray(mask)


def init_params(key):
    ks = jax.random.split(key, 8)
    # char embedding table (padding_idx=0 -> zero row 0)
    char_emb = 0.1 * jax.random.normal(ks[0], (len(I2C), EMB_DIM), jnp.float32)
    char_emb = char_emb.at[PAD_IDX].set(0.0)
    # conv weights, tap-major flattened: [k*E, d]  (torch layout would be [d, E, k])
    conv_ws = []
    for i, (k, d) in enumerate(zip(KERNEL_SIZES, EMIT_DIMS)):
        w = 0.1 * jax.random.normal(ks[1 + i], (k * EMB_DIM, d), jnp.float32)
        conv_ws.append(w)
    # highway (1 layer): pre-transposed weights [D, D], biases [1, D]
    hw_w = 0.1 * jax.random.normal(ks[3], (SUM_EMIT, SUM_EMIT), jnp.float32)
    hw_b = 0.1 * jax.random.normal(ks[4], (1, SUM_EMIT), jnp.float32)
    hw_gw = 0.1 * jax.random.normal(ks[5], (SUM_EMIT, SUM_EMIT), jnp.float32)
    hw_gb = 0.1 * jax.random.normal(ks[6], (1, SUM_EMIT), jnp.float32)
    # final Linear(sum(emit_dims) -> hidden_dim, bias=False), pre-transposed [D, H]
    proj = 0.1 * jax.random.normal(ks[7], (SUM_EMIT, HIDDEN_DIM), jnp.float32)
    return dict(char_emb=char_emb, conv_ws=conv_ws, hw_w=hw_w, hw_b=hw_b,
                hw_gw=hw_gw, hw_gb=hw_gb, proj=proj)


def build_combined_conv_weight(conv_ws):
    # Pack all convs into one tap-major weight [KMAX*E, SUM_EMIT]:
    # conv ci (kernel k) occupies rows [0 : k*E] (taps 0..k-1) of its output-channel slab.
    wcomb = jnp.zeros((KMAX * EMB_DIM, SUM_EMIT), jnp.float32)
    off = 0
    for k, d, w in zip(KERNEL_SIZES, EMIT_DIMS, conv_ws):
        wcomb = wcomb.at[:k * EMB_DIM, off:off + d].set(w)
        off += d
    return wcomb


# ----------------------------------------------------------------------------
# Fused kernel: conv (one matmul) -> masked max -> tanh -> highway -> proj -> x @ y.T
# ----------------------------------------------------------------------------
def char_linear_kernel(windows_ref, wcomb_ref, mask_ref,
                       hw_w_ref, hw_b_ref, hw_gw_ref, hw_gb_ref,
                       proj_ref, x_ref, scores_ref):
    # All conv taps / all convs in a single MXU push: [LK*V, K*E] @ [K*E, D] -> [LK*V, D]
    vals = jnp.dot(windows_ref[...], wcomb_ref[...], preferred_element_type=jnp.float32)
    mask = mask_ref[...]                                           # [LK, D] of {0, -1e30}

    # Running max over time; init from the t=0 window (valid for every conv),
    # static unrolled slices at sublane-aligned multiples of V.
    pooled = vals[0:VSIZE, :] + mask[0:1, :]
    for t in range(1, NUM_WINDOWS):
        pooled = jnp.maximum(pooled, vals[t * VSIZE:(t + 1) * VSIZE, :] + mask[t:t + 1, :])
    h = jnp.tanh(pooled)                                           # [V, D]

    # Highway (num_highway = 1)
    g = jnp.maximum(
        jnp.dot(h, hw_w_ref[...], preferred_element_type=jnp.float32) + hw_b_ref[...], 0.0)
    t_gate = jax.nn.sigmoid(
        jnp.dot(h, hw_gw_ref[...], preferred_element_type=jnp.float32) + hw_gb_ref[...])
    h = t_gate * g + (1.0 - t_gate) * h

    # Final Linear (bias=False): word-embedding table y [V, H] — stays in registers/VMEM.
    y = jnp.dot(h, proj_ref[...], preferred_element_type=jnp.float32)

    # scores = x @ y.T  (trans_b MXU path; at real vocab sizes emit y as [H, V] instead
    # so the output last dim is lane-dense).
    scores_ref[...] = jax.lax.dot_general(
        x_ref[...], y,
        dimension_numbers=(((1,), (1,)), ((), ())),
        preferred_element_type=jnp.float32)


def char_linear_forward(x, char_buffer, params, conv_mask):
    # --- plain-JAX glue (gather + im2col layout + weight packing) ---
    char_embs = params["char_emb"][char_buffer]                    # [V, L, E]
    padded = jnp.pad(char_embs, ((0, 0), (0, KMAX - 1), (0, 0)))   # zero-pad time for im2col
    windows = jnp.stack(
        [padded[:, t:t + KMAX, :].reshape(VSIZE, KMAX * EMB_DIM)
         for t in range(NUM_WINDOWS)], axis=0
    ).reshape(NUM_WINDOWS * VSIZE, KMAX * EMB_DIM)                 # [LK*V, K*E]
    wcomb = build_combined_conv_weight(params["conv_ws"])          # [K*E, D]

    x2d = x.reshape(-1, HIDDEN_DIM)                                # [N, H]
    n = x2d.shape[0]

    vmem_spec = pl.BlockSpec(memory_space=pltpu.MemorySpace.VMEM)
    scores = pl.pallas_call(
        char_linear_kernel,
        out_shape=jax.ShapeDtypeStruct((n, VSIZE), jnp.float32),
        in_specs=[vmem_spec] * 9,
        out_specs=vmem_spec,
    )(windows, wcomb, conv_mask,
      params["hw_w"], params["hw_b"], params["hw_gw"], params["hw_gb"],
      params["proj"], x2d)
    return scores.reshape(x.shape[:-1] + (VSIZE,))


# ----------------------------------------------------------------------------
# Pure-JAX reference (mirrors CharLinear.forward, per-conv / per-time-step)
# ----------------------------------------------------------------------------
def reference_forward(x, char_buffer, params):
    emb = params["char_emb"][char_buffer]                          # [V, L, E]
    pooled_list = []
    for ci, k in enumerate(KERNEL_SIZES):
        lk = MAX_LEN - k + 1
        wflat = params["conv_ws"][ci]
        vals = [emb[:, t:t + k, :].reshape(VSIZE, k * EMB_DIM) @ wflat for t in range(lk)]
        pooled_list.append(jnp.tanh(jnp.max(jnp.stack(vals, 0), axis=0)))
    h = jnp.concatenate(pooled_list, -1)
    g = jax.nn.relu(h @ params["hw_w"] + params["hw_b"])
    t = jax.nn.sigmoid(h @ params["hw_gw"] + params["hw_gb"])
    h = t * g + (1.0 - t) * h
    y = h @ params["proj"]
    return (x.reshape(-1, HIDDEN_DIM) @ y.T).reshape(x.shape[:-1] + (VSIZE,))


if __name__ == "__main__":
    key = jax.random.PRNGKey(0)
    kp, kx = jax.random.split(key)
    params = init_params(kp)
    char_buffer = build_char_buffer()                              # [16, 6] int32
    conv_mask = build_conv_mask()                                  # [6, 48] float32

    # x: (batch=2, seq=8, hidden=32) -> output (2, 8, V=16)
    x = jax.random.normal(kx, (2, 8, HIDDEN_DIM), jnp.float32)

    out = jax.block_until_ready(char_linear_forward(x, char_buffer, params, conv_mask))
    ref = jax.block_until_ready(reference_forward(x, char_buffer, params))

    assert out.shape == (2, 8, VSIZE), out.shape
    np.testing.assert_allclose(np.asarray(out), np.asarray(ref), rtol=2e-2, atol=2e-2)
    print("KERNEL_OK")
</pallas_src>

<mosaic_0001>
module attributes {stable_mosaic.version = 11 : i64} {
  func.func @char_linear_kernel(%arg0: memref<96x32xf32, #tpu.memory_space<vmem>>, %arg1: memref<32x48xf32, #tpu.memory_space<vmem>>, %arg2: memref<6x48xf32, #tpu.memory_space<vmem>>, %arg3: memref<48x48xf32, #tpu.memory_space<vmem>>, %arg4: memref<1x48xf32, #tpu.memory_space<vmem>>, %arg5: memref<48x48xf32, #tpu.memory_space<vmem>>, %arg6: memref<1x48xf32, #tpu.memory_space<vmem>>, %arg7: memref<48x32xf32, #tpu.memory_space<vmem>>, %arg8: memref<16x32xf32, #tpu.memory_space<vmem>>, %arg9: memref<16x16xf32, #tpu.memory_space<vmem>>) attributes {dimension_semantics = [], scalar_prefetch = 0 : i64, scratch_operands = 0 : i64, tpu.core_type = #tpu.core_type<tc>} {
    %c0 = arith.constant 0 : index
    %c0_0 = arith.constant 0 : index
    %0 = vector.load %arg0[%c0, %c0_0] : memref<96x32xf32, #tpu.memory_space<vmem>>, vector<96x32xf32>
    %c0_1 = arith.constant 0 : index
    %c0_2 = arith.constant 0 : index
    %1 = vector.load %arg1[%c0_1, %c0_2] : memref<32x48xf32, #tpu.memory_space<vmem>>, vector<32x48xf32>
    %cst = arith.constant dense<0.000000e+00> : vector<96x48xf32>
    %2 = tpu.matmul %0, %1, %cst {dimension_numbers = #tpu.dot_dimension_numbers<[1], [0], [0], [1], [0, 0, 1, 1], [], []>} : vector<96x32xf32>, vector<32x48xf32>, vector<96x48xf32> -> vector<96x48xf32>
    %c0_3 = arith.constant 0 : index
    %c0_4 = arith.constant 0 : index
    %3 = vector.load %arg2[%c0_3, %c0_4] : memref<6x48xf32, #tpu.memory_space<vmem>>, vector<6x48xf32>
    %4 = vector.extract_strided_slice %2 {offsets = [0, 0], sizes = [16, 48], strides = [1, 1]} : vector<96x48xf32> to vector<16x48xf32>
    %5 = vector.extract_strided_slice %3 {offsets = [0, 0], sizes = [1, 48], strides = [1, 1]} : vector<6x48xf32> to vector<1x48xf32>
    %6 = vector.broadcast %5 : vector<1x48xf32> to vector<16x48xf32>
    %7 = arith.addf %4, %6 : vector<16x48xf32>
    %8 = vector.extract_strided_slice %2 {offsets = [16, 0], sizes = [16, 48], strides = [1, 1]} : vector<96x48xf32> to vector<16x48xf32>
    %9 = vector.extract_strided_slice %3 {offsets = [1, 0], sizes = [1, 48], strides = [1, 1]} : vector<6x48xf32> to vector<1x48xf32>
    %10 = vector.broadcast %9 : vector<1x48xf32> to vector<16x48xf32>
    %11 = arith.addf %8, %10 : vector<16x48xf32>
    %12 = arith.maximumf %7, %11 : vector<16x48xf32>
    %13 = vector.extract_strided_slice %2 {offsets = [32, 0], sizes = [16, 48], strides = [1, 1]} : vector<96x48xf32> to vector<16x48xf32>
    %14 = vector.extract_strided_slice %3 {offsets = [2, 0], sizes = [1, 48], strides = [1, 1]} : vector<6x48xf32> to vector<1x48xf32>
    %15 = vector.broadcast %14 : vector<1x48xf32> to vector<16x48xf32>
    %16 = arith.addf %13, %15 : vector<16x48xf32>
    %17 = arith.maximumf %12, %16 : vector<16x48xf32>
    %18 = vector.extract_strided_slice %2 {offsets = [48, 0], sizes = [16, 48], strides = [1, 1]} : vector<96x48xf32> to vector<16x48xf32>
    %19 = vector.extract_strided_slice %3 {offsets = [3, 0], sizes = [1, 48], strides = [1, 1]} : vector<6x48xf32> to vector<1x48xf32>
    %20 = vector.broadcast %19 : vector<1x48xf32> to vector<16x48xf32>
    %21 = arith.addf %18, %20 : vector<16x48xf32>
    %22 = arith.maximumf %17, %21 : vector<16x48xf32>
    %23 = vector.extract_strided_slice %2 {offsets = [64, 0], sizes = [16, 48], strides = [1, 1]} : vector<96x48xf32> to vector<16x48xf32>
    %24 = vector.extract_strided_slice %3 {offsets = [4, 0], sizes = [1, 48], strides = [1, 1]} : vector<6x48xf32> to vector<1x48xf32>
    %25 = vector.broadcast %24 : vector<1x48xf32> to vector<16x48xf32>
    %26 = arith.addf %23, %25 : vector<16x48xf32>
    %27 = arith.maximumf %22, %26 : vector<16x48xf32>
    %28 = vector.extract_strided_slice %2 {offsets = [80, 0], sizes = [16, 48], strides = [1, 1]} : vector<96x48xf32> to vector<16x48xf32>
    %29 = vector.extract_strided_slice %3 {offsets = [5, 0], sizes = [1, 48], strides = [1, 1]} : vector<6x48xf32> to vector<1x48xf32>
    %30 = vector.broadcast %29 : vector<1x48xf32> to vector<16x48xf32>
    %31 = arith.addf %28, %30 : vector<16x48xf32>
    %32 = arith.maximumf %27, %31 : vector<16x48xf32>
    %33 = math.tanh %32 : vector<16x48xf32>
    %c0_5 = arith.constant 0 : index
    %c0_6 = arith.constant 0 : index
    %34 = vector.load %arg3[%c0_5, %c0_6] : memref<48x48xf32, #tpu.memory_space<vmem>>, vector<48x48xf32>
    %cst_7 = arith.constant dense<0.000000e+00> : vector<16x48xf32>
    %35 = tpu.matmul %33, %34, %cst_7 {dimension_numbers = #tpu.dot_dimension_numbers<[1], [0], [0], [1], [0, 0, 1, 1], [], []>} : vector<16x48xf32>, vector<48x48xf32>, vector<16x48xf32> -> vector<16x48xf32>
    %c0_8 = arith.constant 0 : index
    %c0_9 = arith.constant 0 : index
    %36 = vector.load %arg4[%c0_8, %c0_9] : memref<1x48xf32, #tpu.memory_space<vmem>>, vector<1x48xf32>
    %37 = vector.broadcast %36 : vector<1x48xf32> to vector<16x48xf32>
    %38 = arith.addf %35, %37 : vector<16x48xf32>
    %cst_10 = arith.constant 0.000000e+00 : f32
    %39 = vector.broadcast %cst_10 : f32 to vector<16x48xf32>
    %40 = arith.maximumf %38, %39 : vector<16x48xf32>
    %c0_11 = arith.constant 0 : index
    %c0_12 = arith.constant 0 : index
    %41 = vector.load %arg5[%c0_11, %c0_12] : memref<48x48xf32, #tpu.memory_space<vmem>>, vector<48x48xf32>
    %cst_13 = arith.constant dense<0.000000e+00> : vector<16x48xf32>
    %42 = tpu.matmul %33, %41, %cst_13 {dimension_numbers = #tpu.dot_dimension_numbers<[1], [0], [0], [1], [0, 0, 1, 1], [], []>} : vector<16x48xf32>, vector<48x48xf32>, vector<16x48xf32> -> vector<16x48xf32>
    %c0_14 = arith.constant 0 : index
    %c0_15 = arith.constant 0 : index
    %43 = vector.load %arg6[%c0_14, %c0_15] : memref<1x48xf32, #tpu.memory_space<vmem>>, vector<1x48xf32>
    %44 = vector.broadcast %43 : vector<1x48xf32> to vector<16x48xf32>
    %45 = arith.addf %42, %44 : vector<16x48xf32>
    %46 = arith.negf %45 : vector<16x48xf32>
    %47 = math.exp %46 : vector<16x48xf32>
    %cst_16 = arith.constant 1.000000e+00 : f32
    %48 = vector.broadcast %cst_16 : f32 to vector<16x48xf32>
    %49 = arith.addf %48, %47 : vector<16x48xf32>
    %50 = arith.divf %48, %49 : vector<16x48xf32>
    %51 = arith.mulf %50, %40 : vector<16x48xf32>
    %cst_17 = arith.constant 1.000000e+00 : f32
    %52 = vector.broadcast %cst_17 : f32 to vector<16x48xf32>
    %53 = arith.subf %52, %50 : vector<16x48xf32>
    %54 = arith.mulf %53, %33 : vector<16x48xf32>
    %55 = arith.addf %51, %54 : vector<16x48xf32>
    %c0_18 = arith.constant 0 : index
    %c0_19 = arith.constant 0 : index
    %56 = vector.load %arg7[%c0_18, %c0_19] : memref<48x32xf32, #tpu.memory_space<vmem>>, vector<48x32xf32>
    %cst_20 = arith.constant dense<0.000000e+00> : vector<16x32xf32>
    %57 = tpu.matmul %55, %56, %cst_20 {dimension_numbers = #tpu.dot_dimension_numbers<[1], [0], [0], [1], [0, 0, 1, 1], [], []>} : vector<16x48xf32>, vector<48x32xf32>, vector<16x32xf32> -> vector<16x32xf32>
    %c0_21 = arith.constant 0 : index
    %c0_22 = arith.constant 0 : index
    %58 = vector.load %arg8[%c0_21, %c0_22] : memref<16x32xf32, #tpu.memory_space<vmem>>, vector<16x32xf32>
    %cst_23 = arith.constant dense<0.000000e+00> : vector<16x16xf32>
    %59 = tpu.matmul %58, %57, %cst_23 {dimension_numbers = #tpu.dot_dimension_numbers<[1], [1], [0], [0], [0, 0, 1, 0], [], []>} : vector<16x32xf32>, vector<16x32xf32>, vector<16x16xf32> -> vector<16x16xf32>
    %c0_24 = arith.constant 0 : index
    %c0_25 = arith.constant 0 : index
    %60 = vector.load %arg9[%c0_24, %c0_25] : memref<16x16xf32, #tpu.memory_space<vmem>>, vector<16x16xf32>
    tpu.vector_store %arg9[%c0_24, %c0_25], %59 {strides = array<i32>} : memref<16x16xf32, #tpu.memory_space<vmem>>, vector<16x16xf32>,
    return
  }
}

</mosaic_0001>

<llo_original>
// kernel: tpu_custom_call.1
$region0: #{tpu_custom_call.1}
  #allocation0 [shape = 'u32[]', space=smem, size = 0x4, offset = 0x4, fixed_abs, tag = 'smem constant byte address 0x4 - core index']
  #allocation1 [shape = 'u32[144,128]{1,0:T(1,128)}', space=vmem, size = 0x12000, scoped, tag = 'internal scratch']
  %s0 = inlined_call_operand.vmem [shape: f32[96,32], index: 0, kind: input, shape index: {}]
  %s1 = inlined_call_operand.vmem [shape: f32[32,48], index: 1, kind: input, shape index: {}]
  %s2 = inlined_call_operand.vmem [shape: f32[6,48], index: 2, kind: input, shape index: {}]
  %s3 = inlined_call_operand.vmem [shape: f32[48,48], index: 3, kind: input, shape index: {}]
  %s4 = inlined_call_operand.vmem [shape: f32[1,48], index: 4, kind: input, shape index: {}]
  %s5 = inlined_call_operand.vmem [shape: f32[48,48], index: 5, kind: input, shape index: {}]
  %s6 = inlined_call_operand.vmem [shape: f32[1,48], index: 6, kind: input, shape index: {}]
  %s7 = inlined_call_operand.vmem [shape: f32[48,32], index: 7, kind: input, shape index: {}]
  %s8 = inlined_call_operand.vmem [shape: f32[16,32], index: 8, kind: input, shape index: {}]
  %s9 = inlined_call_operand.hbm [shape: f32[16,16], index: 9, kind: output, shape index: {}]
  %s10 = sld [smem:[#allocation0]]
  $region46: #{tpu_custom_call.1} parent=0
    _
  %s12 = ssub.s32 1, %s10
  %s13 = scalar_select 0, %s12, %s10
  $region1: #{tpu_custom_call.1} parent=0
    #allocation2 [shape = 'u8[8192]{0}', space=vmem, size = 0x2000, scoped, tag = 'output window, operand 0, single buffered']
    #allocation3 [shape = 's32[1]{0}', space=sflag, size = 0x4, scoped, tag = 'scoped memory for tpu_custom_call.1']
    %14 = vsyncpa [#allocation3], 0
    // Predicated region
    $region2: #{tpu_custom_call.1} parent=1 // pred_check
      _
    $region3: #{tpu_custom_call.1} parent=1 // pred_check_branch
      %16 = sbr.rel (0) target = $region5
    $region4: #{tpu_custom_call.1} parent=1 // pred_region
      _
    $region5: #{tpu_custom_call.1} parent=1 // pred_fallthru
      _
    // Predicated region
    $region6: #{tpu_custom_call.1} parent=1 // pred_check
      _
    $region7: #{tpu_custom_call.1} parent=1 // pred_check_branch
      %18 = sbr.rel (0) target = $region9
    $region8: #{tpu_custom_call.1} parent=1 // pred_region
      _
    $region9: #{tpu_custom_call.1} parent=1 // pred_fallthru
      _
    // Predicated region
    $region10: #{tpu_custom_call.1} parent=1 // pred_check
      _
    $region11: #{tpu_custom_call.1} parent=1 // pred_check_branch
      %20 = sbr.rel (0) target = $region13
    $region12: #{tpu_custom_call.1} parent=1 // pred_region
      _
    $region13: #{tpu_custom_call.1} parent=1 // pred_fallthru
      _
    // Predicated region
    $region14: #{tpu_custom_call.1} parent=1 // pred_check
      _
    $region15: #{tpu_custom_call.1} parent=1 // pred_check_branch
      %22 = sbr.rel (0) target = $region17
    $region16: #{tpu_custom_call.1} parent=1 // pred_region
      _
    $region17: #{tpu_custom_call.1} parent=1 // pred_fallthru
      _
    // Predicated region
    $region18: #{tpu_custom_call.1} parent=1 // pred_check
      _
    $region19: #{tpu_custom_call.1} parent=1 // pred_check_branch
      %24 = sbr.rel (0) target = $region21
    $region20: #{tpu_custom_call.1} parent=1 // pred_region
      _
    $region21: #{tpu_custom_call.1} parent=1 // pred_fallthru
      _
    // Predicated region
    $region22: #{tpu_custom_call.1} parent=1 // pred_check
      _
    $region23: #{tpu_custom_call.1} parent=1 // pred_check_branch
      %26 = sbr.rel (0) target = $region25
    $region24: #{tpu_custom_call.1} parent=1 // pred_region
      _
    $region25: #{tpu_custom_call.1} parent=1 // pred_fallthru
      _
    // Predicated region
    $region26: #{tpu_custom_call.1} parent=1 // pred_check
      _
    $region27: #{tpu_custom_call.1} parent=1 // pred_check_branch
      %28 = sbr.rel (0) target = $region29
    $region28: #{tpu_custom_call.1} parent=1 // pred_region
      _
    $region29: #{tpu_custom_call.1} parent=1 // pred_fallthru
      _
    // Predicated region
    $region30: #{tpu_custom_call.1} parent=1 // pred_check
      _
    $region31: #{tpu_custom_call.1} parent=1 // pred_check_branch
      %30 = sbr.rel (0) target = $region33
    $region32: #{tpu_custom_call.1} parent=1 // pred_region
      _
    $region33: #{tpu_custom_call.1} parent=1 // pred_fallthru
      _
    // Predicated region
    $region34: #{tpu_custom_call.1} parent=1 // pred_check
      _
    $region35: #{tpu_custom_call.1} parent=1 // pred_check_branch
      %32 = sbr.rel (0) target = $region37
    $region36: #{tpu_custom_call.1} parent=1 // pred_region
      _
    $region37: #{tpu_custom_call.1} parent=1 // pred_fallthru
      _
    %v33 = vld [vmem:[%s0] sm:$0xff]
    %v34 = vld [vmem:[%s0 + $0x8] sm:$0xff]
    %v35 = vld [vmem:[%s0 + $0x10] sm:$0xff]
    %v36 = vld [vmem:[%s0 + $0x18] sm:$0xff]
    %v37 = vld [vmem:[%s0 + $0x20] sm:$0xff]
    %v38 = vld [vmem:[%s0 + $0x28] sm:$0xff]
    %v39 = vld [vmem:[%s0 + $0x30] sm:$0xff]
    %v40 = vld [vmem:[%s0 + $0x38] sm:$0xff]
    %v41 = vld [vmem:[%s0 + $0x40] sm:$0xff]
    %v42 = vld [vmem:[%s0 + $0x48] sm:$0xff]
    %v43 = vld [vmem:[%s0 + $0x50] sm:$0xff]
    %v44 = vld [vmem:[%s0 + $0x58] sm:$0xff]
    %v45 = vld [vmem:[%s1] sm:$0xff]
    %v46 = vld [vmem:[%s1 + $0x8] sm:$0xff]
    %v47 = vld [vmem:[%s1 + $0x10] sm:$0xff]
    %v48 = vld [vmem:[%s1 + $0x18] sm:$0xff]
    %vm49 = vcmask 261120
    %v51 = vsel %vm49, %v33, 0
    %v54 = vsel %vm49, %v34, 0
    %v57 = vsel %vm49, %v35, 0
    %v60 = vsel %vm49, %v36, 0
    %v63 = vsel %vm49, %v37, 0
    %v66 = vsel %vm49, %v38, 0
    %v69 = vsel %vm49, %v39, 0
    %v72 = vsel %vm49, %v40, 0
    %v75 = vsel %vm49, %v41, 0
    %v78 = vsel %vm49, %v42, 0
    %v81 = vsel %vm49, %v43, 0
    %v84 = vsel %vm49, %v44, 0
    %86 = vmatprep.subr.mxu0 0.0
    %87 = vmatpush1.msra.mxu0 0.0
    %88 = vmatprep.subr.mxu0 0.0
    %89 = vmatpush1.msra.mxu0 0.0
    %90 = vmatprep.subr.mxu0 0.0
    %91 = vmatpush1.msra.mxu0 0.0
    %92 = vmatprep.subr.mxu0 0.0
    %93 = vmatpush1.msra.mxu0 0.0
    %94 = vmatprep.subr.mxu0 0.0
    %95 = vmatpush1.msra.mxu0 0.0
    %96 = vmatprep.subr.mxu0 0.0
    %97 = vmatpush1.msra.mxu0 0.0
    %98 = vmatprep.subr.mxu0 0.0
    %99 = vmatpush1.msra.mxu0 0.0
    %100 = vmatprep.subr.mxu0 0.0
    %101 = vmatpush1.msra.mxu0 0.0
    %102 = vmatprep.subr.mxu0 0.0
    %103 = vmatpush1.msra.mxu0 0.0
    %104 = vmatprep.subr.mxu0 0.0
    %105 = vmatpush1.msra.mxu0 0.0
    %106 = vmatprep.subr.mxu0 0.0
    %107 = vmatpush1.msra.mxu0 0.0
    %108 = vmatprep.subr.mxu0 0.0
    %109 = vmatpush1.msra.mxu0 0.0
    %110 = vmatprep.subr.mxu0 0.0
    %111 = vmatpush1.msra.mxu0 %v48
    %112 = vmatprep.subr.mxu0 0.0
    %113 = vmatpush1.msra.mxu0 %v47
    %114 = vmatprep.subr.mxu0 0.0
    %115 = vmatpush1.msra.mxu0 %v46
    %116 = vmatprep.subr.mxu0 0.0
    %117 = vmatpush1.msra.mxu0 %v45
    %118 = vmatprep.subr.mxu0 0.0
    %119 = vmatpush2.msra.mxu0 0.0
    %120 = vmatprep.subr.mxu0 0.0
    %121 = vmatpush2.msra.mxu0 0.0
    %122 = vmatprep.subr.mxu0 0.0
    %123 = vmatpush2.msra.mxu0 0.0
    %124 = vmatprep.subr.mxu0 0.0
    %125 = vmatpush2.msra.mxu0 0.0
    %126 = vmatprep.subr.mxu0 0.0
    %127 = vmatpush2.msra.mxu0 0.0
    %128 = vmatprep.subr.mxu0 0.0
    %129 = vmatpush2.msra.mxu0 0.0
    %130 = vmatprep.subr.mxu0 0.0
    %131 = vmatpush2.msra.mxu0 0.0
    %132 = vmatprep.subr.mxu0 0.0
    %133 = vmatpush2.msra.mxu0 0.0
    %134 = vmatprep.subr.mxu0 0.0
    %135 = vmatpush2.msra.mxu0 0.0
    %136 = vmatprep.subr.mxu0 0.0
    %137 = vmatpush2.msra.mxu0 0.0
    %138 = vmatprep.subr.mxu0 0.0
    %139 = vmatpush2.msra.mxu0 0.0
    %140 = vmatprep.subr.mxu0 0.0
    %141 = vmatpush2.msra.mxu0 0.0
    %142 = vmatprep.subr.mxu0 0.0
    %143 = vmatpush2.msra.mxu0 0.0
    %144 = vmatprep.subr.mxu0 0.0
    %145 = vmatpush2.msra.mxu0 0.0
    %146 = vmatprep.subr.mxu0 0.0
    %147 = vmatpush2.msra.mxu0 0.0
    %148 = vmatprep.subr.mxu0 0.0
    %149 = vmatpush2.msra.mxu0 0.0
    %150 = vmatprep.mubr.f32.mxu0 0.0
    %151 = vmatmul.mubr.f32.gmra.mxu0 %v51
    %v152 = vpop.f32.mrf.mxu0
    %v153 = vadd.f32 0.0, %v152
    %v154 = vpop.f32.mrf.mxu0
    %155 = vmatprep.mubr.f32.mxu0 0.0
    %156 = vmatmul.mubr.f32.gmra.mxu0 %v54
    %v157 = vpop.f32.mrf.mxu0
    %v158 = vadd.f32 0.0, %v157
    %v159 = vpop.f32.mrf.mxu0
    %160 = vmatprep.mubr.f32.mxu0 0.0
    %161 = vmatmul.mubr.f32.gmra.mxu0 %v57
    %v162 = vpop.f32.mrf.mxu0
    %v163 = vadd.f32 0.0, %v162
    %v164 = vpop.f32.mrf.mxu0
    %165 = vmatprep.mubr.f32.mxu0 0.0
    %166 = vmatmul.mubr.f32.gmra.mxu0 %v60
    %v167 = vpop.f32.mrf.mxu0
    %v168 = vadd.f32 0.0, %v167
    %v169 = vpop.f32.mrf.mxu0
    %170 = vmatprep.mubr.f32.mxu0 0.0
    %171 = vmatmul.mubr.f32.gmra.mxu0 %v63
    %v172 = vpop.f32.mrf.mxu0
    %v173 = vadd.f32 0.0, %v172
    %v174 = vpop.f32.mrf.mxu0
    %175 = vmatprep.mubr.f32.mxu0 0.0
    %176 = vmatmul.mubr.f32.gmra.mxu0 %v66
    %v177 = vpop.f32.mrf.mxu0
    %v178 = vadd.f32 0.0, %v177
    %v179 = vpop.f32.mrf.mxu0
    %180 = vmatprep.mubr.f32.mxu0 0.0
    %181 = vmatmul.mubr.f32.gmra.mxu0 %v69
    %v182 = vpop.f32.mrf.mxu0
    %v183 = vadd.f32 0.0, %v182
    %v184 = vpop.f32.mrf.mxu0
    %185 = vmatprep.mubr.f32.mxu0 0.0
    %186 = vmatmul.mubr.f32.gmra.mxu0 %v72
    %v187 = vpop.f32.mrf.mxu0
    %v188 = vadd.f32 0.0, %v187
    %v189 = vpop.f32.mrf.mxu0
    %190 = vmatprep.mubr.f32.mxu0 0.0
    %191 = vmatmul.mubr.f32.gmra.mxu0 %v75
    %v192 = vpop.f32.mrf.mxu0
    %v193 = vadd.f32 0.0, %v192
    %v194 = vpop.f32.mrf.mxu0
    %195 = vmatprep.mubr.f32.mxu0 0.0
    %196 = vmatmul.mubr.f32.gmra.mxu0 %v78
    %v197 = vpop.f32.mrf.mxu0
    %v198 = vadd.f32 0.0, %v197
    %v199 = vpop.f32.mrf.mxu0
    %200 = vmatprep.mubr.f32.mxu0 0.0
    %201 = vmatmul.mubr.f32.gmra.mxu0 %v81
    %v202 = vpop.f32.mrf.mxu0
    %v203 = vadd.f32 0.0, %v202
    %v204 = vpop.f32.mrf.mxu0
    %205 = vmatprep.mubr.f32.mxu0 0.0
    %206 = vmatmul.mubr.f32.gmra.mxu0 %v84
    %v207 = vpop.f32.mrf.mxu0
    %v208 = vadd.f32 0.0, %v207
    %v209 = vpop.f32.mrf.mxu0
    %210 = vdwg.mxu0
    %v211 = vld [vmem:[%s2] sm:$0x3f]
    %v212 = vlaneseq
    %v213 = vshrl.u32 %v212, 7
    %v214 = vsub.s32 0, %v213
    %v215 = vrot.slane %v211, %v214
    %v216 = vadd.f32 %v153, %v215
    %v217 = vadd.f32 %v158, %v215
    %v218 = vlaneseq
    %v219 = vshrl.u32 %v218, 7
    %v220 = vsub.s32 1, %v219
    %v221 = vrot.slane %v211, %v220
    %v222 = vadd.f32 %v163, %v221
    %v223 = vadd.f32 %v168, %v221
    %v224 = vmax.f32 %v216, %v222
    %v225 = vmax.f32 %v217, %v223
    %v226 = vlaneseq
    %v227 = vshrl.u32 %v226, 7
    %v228 = vsub.s32 2, %v227
    %v229 = vrot.slane %v211, %v228
    %v230 = vadd.f32 %v173, %v229
    %v231 = vadd.f32 %v178, %v229
    %v232 = vmax.f32 %v224, %v230
    %v233 = vmax.f32 %v225, %v231
    %v234 = vlaneseq
    %v235 = vshrl.u32 %v234, 7
    %v236 = vsub.s32 3, %v235
    %v237 = vrot.slane %v211, %v236
    %v238 = vadd.f32 %v183, %v237
    %v239 = vadd.f32 %v188, %v237
    %v240 = vmax.f32 %v232, %v238
    %v241 = vmax.f32 %v233, %v239
    %v242 = vlaneseq
    %v243 = vshrl.u32 %v242, 7
    %v244 = vsub.s32 4, %v243
    %v245 = vrot.slane %v211, %v244
    %v246 = vadd.f32 %v193, %v245
    %v247 = vadd.f32 %v198, %v245
    %v248 = vmax.f32 %v240, %v246
    %v249 = vmax.f32 %v241, %v247
    %v250 = vlaneseq
    %v251 = vshrl.u32 %v250, 7
    %v252 = vsub.s32 5, %v251
    %v253 = vrot.slane %v211, %v252
    %v254 = vadd.f32 %v203, %v253
    %v255 = vadd.f32 %v208, %v253
    %v256 = vmax.f32 %v248, %v254
    %v257 = vmax.f32 %v249, %v255
    %v258 = vtanh.pop %v256
    %v259 = vtanh.pop %v257
    %v260 = vld [vmem:[%s3] sm:$0xff]
    %v261 = vld [vmem:[%s3 + $0x8] sm:$0xff]
    %v262 = vld [vmem:[%s3 + $0x10] sm:$0xff]
    %v263 = vld [vmem:[%s3 + $0x18] sm:$0xff]
    %v264 = vld [vmem:[%s3 + $0x20] sm:$0xff]
    %v265 = vld [vmem:[%s3 + $0x28] sm:$0xff]
    %v266 = vld [vmem:[%s4] sm:$0x1]
    %v268 = vlaneseq
    %v269 = vshrl.u32 %v268, 7
    %v270 = vsub.s32 0, %v269
    %v271 = vrot.slane %v266, %v270
    %vm273 = vcmask 392192
    %v275 = vsel %vm273, %v258, 0
    %v278 = vsel %vm273, %v259, 0
    %280 = vmatprep.subr.mxu0 0.0
    %281 = vmatpush1.msra.mxu0 0.0
    %282 = vmatprep.subr.mxu0 0.0
    %283 = vmatpush1.msra.mxu0 0.0
    %284 = vmatprep.subr.mxu0 0.0
    %285 = vmatpush1.msra.mxu0 0.0
    %286 = vmatprep.subr.mxu0 0.0
    %287 = vmatpush1.msra.mxu0 0.0
    %288 = vmatprep.subr.mxu0 0.0
    %289 = vmatpush1.msra.mxu0 0.0
    %290 = vmatprep.subr.mxu0 0.0
    %291 = vmatpush1.msra.mxu0 0.0
    %292 = vmatprep.subr.mxu0 0.0
    %293 = vmatpush1.msra.mxu0 0.0
    %294 = vmatprep.subr.mxu0 0.0
    %295 = vmatpush1.msra.mxu0 0.0
    %296 = vmatprep.subr.mxu0 0.0
    %297 = vmatpush1.msra.mxu0 0.0
    %298 = vmatprep.subr.mxu0 0.0
    %299 = vmatpush1.msra.mxu0 0.0
    %300 = vmatprep.subr.mxu0 0.0
    %301 = vmatpush1.msra.mxu0 %v265
    %302 = vmatprep.subr.mxu0 0.0
    %303 = vmatpush1.msra.mxu0 %v264
    %304 = vmatprep.subr.mxu0 0.0
    %305 = vmatpush1.msra.mxu0 %v263
    %306 = vmatprep.subr.mxu0 0.0
    %307 = vmatpush1.msra.mxu0 %v262
    %308 = vmatprep.subr.mxu0 0.0
    %309 = vmatpush1.msra.mxu0 %v261
    %310 = vmatprep.subr.mxu0 0.0
    %311 = vmatpush1.msra.mxu0 %v260
    %312 = vmatprep.subr.mxu0 0.0
    %313 = vmatpush2.msra.mxu0 0.0
    %314 = vmatprep.subr.mxu0 0.0
    %315 = vmatpush2.msra.mxu0 0.0
    %316 = vmatprep.subr.mxu0 0.0
    %317 = vmatpush2.msra.mxu0 0.0
    %318 = vmatprep.subr.mxu0 0.0
    %319 = vmatpush2.msra.mxu0 0.0
    %320 = vmatprep.subr.mxu0 0.0
    %321 = vmatpush2.msra.mxu0 0.0
    %322 = vmatprep.subr.mxu0 0.0
    %323 = vmatpush2.msra.mxu0 0.0
    %324 = vmatprep.subr.mxu0 0.0
    %325 = vmatpush2.msra.mxu0 0.0
    %326 = vmatprep.subr.mxu0 0.0
    %327 = vmatpush2.msra.mxu0 0.0
    %328 = vmatprep.subr.mxu0 0.0
    %329 = vmatpush2.msra.mxu0 0.0
    %330 = vmatprep.subr.mxu0 0.0
    %331 = vmatpush2.msra.mxu0 0.0
    %332 = vmatprep.subr.mxu0 0.0
    %333 = vmatpush2.msra.mxu0 0.0
    %334 = vmatprep.subr.mxu0 0.0
    %335 = vmatpush2.msra.mxu0 0.0
    %336 = vmatprep.subr.mxu0 0.0
    %337 = vmatpush2.msra.mxu0 0.0
    %338 = vmatprep.subr.mxu0 0.0
    %339 = vmatpush2.msra.mxu0 0.0
    %340 = vmatprep.subr.mxu0 0.0
    %341 = vmatpush2.msra.mxu0 0.0
    %342 = vmatprep.subr.mxu0 0.0
    %343 = vmatpush2.msra.mxu0 0.0
    %344 = vmatprep.mubr.f32.mxu0 0.0
    %345 = vmatmul.mubr.f32.gmra.mxu0 %v275
    %v346 = vpop.f32.mrf.mxu0
    %v347 = vadd.f32 %v271, %v346
    %v348 = vpop.f32.mrf.mxu0
    %349 = vmatprep.mubr.f32.mxu0 0.0
    %350 = vmatmul.mubr.f32.gmra.mxu0 %v278
    %v351 = vpop.f32.mrf.mxu0
    %v352 = vadd.f32 %v271, %v351
    %v353 = vpop.f32.mrf.mxu0
    %354 = vdwg.mxu0
    %v355 = vmax.f32 %v347, 0.0
    %v356 = vmax.f32 %v352, 0.0
    %v357 = vld [vmem:[%s5] sm:$0xff]
    %v358 = vld [vmem:[%s5 + $0x8] sm:$0xff]
    %v359 = vld [vmem:[%s5 + $0x10] sm:$0xff]
    %v360 = vld [vmem:[%s5 + $0x18] sm:$0xff]
    %v361 = vld [vmem:[%s5 + $0x20] sm:$0xff]
    %v362 = vld [vmem:[%s5 + $0x28] sm:$0xff]
    %v363 = vld [vmem:[%s6] sm:$0x1]
    %v365 = vlaneseq
    %v366 = vshrl.u32 %v365, 7
    %v367 = vsub.s32 0, %v366
    %v368 = vrot.slane %v363, %v367
    %370 = vmatprep.subr.mxu0 0.0
    %371 = vmatpush1.msra.mxu0 0.0
    %372 = vmatprep.subr.mxu0 0.0
    %373 = vmatpush1.msra.mxu0 0.0
    %374 = vmatprep.subr.mxu0 0.0
    %375 = vmatpush1.msra.mxu0 0.0
    %376 = vmatprep.subr.mxu0 0.0
    %377 = vmatpush1.msra.mxu0 0.0
    %378 = vmatprep.subr.mxu0 0.0
    %379 = vmatpush1.msra.mxu0 0.0
    %380 = vmatprep.subr.mxu0 0.0
    %381 = vmatpush1.msra.mxu0 0.0
    %382 = vmatprep.subr.mxu0 0.0
    %383 = vmatpush1.msra.mxu0 0.0
    %384 = vmatprep.subr.mxu0 0.0
    %385 = vmatpush1.msra.mxu0 0.0
    %386 = vmatprep.subr.mxu0 0.0
    %387 = vmatpush1.msra.mxu0 0.0
    %388 = vmatprep.subr.mxu0 0.0
    %389 = vmatpush1.msra.mxu0 0.0
    %390 = vmatprep.subr.mxu0 0.0
    %391 = vmatpush1.msra.mxu0 %v362
    %392 = vmatprep.subr.mxu0 0.0
    %393 = vmatpush1.msra.mxu0 %v361
    %394 = vmatprep.subr.mxu0 0.0
    %395 = vmatpush1.msra.mxu0 %v360
    %396 = vmatprep.subr.mxu0 0.0
    %397 = vmatpush1.msra.mxu0 %v359
    %398 = vmatprep.subr.mxu0 0.0
    %399 = vmatpush1.msra.mxu0 %v358
    %400 = vmatprep.subr.mxu0 0.0
    %401 = vmatpush1.msra.mxu0 %v357
    %402 = vmatprep.subr.mxu0 0.0
    %403 = vmatpush2.msra.mxu0 0.0
    %404 = vmatprep.subr.mxu0 0.0
    %405 = vmatpush2.msra.mxu0 0.0
    %406 = vmatprep.subr.mxu0 0.0
    %407 = vmatpush2.msra.mxu0 0.0
    %408 = vmatprep.subr.mxu0 0.0
    %409 = vmatpush2.msra.mxu0 0.0
    %410 = vmatprep.subr.mxu0 0.0
    %411 = vmatpush2.msra.mxu0 0.0
    %412 = vmatprep.subr.mxu0 0.0
    %413 = vmatpush2.msra.mxu0 0.0
    %414 = vmatprep.subr.mxu0 0.0
    %415 = vmatpush2.msra.mxu0 0.0
    %416 = vmatprep.subr.mxu0 0.0
    %417 = vmatpush2.msra.mxu0 0.0
    %418 = vmatprep.subr.mxu0 0.0
    %419 = vmatpush2.msra.mxu0 0.0
    %420 = vmatprep.subr.mxu0 0.0
    %421 = vmatpush2.msra.mxu0 0.0
    %422 = vmatprep.subr.mxu0 0.0
    %423 = vmatpush2.msra.mxu0 0.0
    %424 = vmatprep.subr.mxu0 0.0
    %425 = vmatpush2.msra.mxu0 0.0
    %426 = vmatprep.subr.mxu0 0.0
    %427 = vmatpush2.msra.mxu0 0.0
    %428 = vmatprep.subr.mxu0 0.0
    %429 = vmatpush2.msra.mxu0 0.0
    %430 = vmatprep.subr.mxu0 0.0
    %431 = vmatpush2.msra.mxu0 0.0
    %432 = vmatprep.subr.mxu0 0.0
    %433 = vmatpush2.msra.mxu0 0.0
    %434 = vmatprep.mubr.f32.mxu0 0.0
    %435 = vmatmul.mubr.f32.gmra.mxu0 %v275
    %v436 = vpop.f32.mrf.mxu0
    %v437 = vadd.f32 %v368, %v436
    %v438 = vpop.f32.mrf.mxu0
    %439 = vmatprep.mubr.f32.mxu0 0.0
    %440 = vmatmul.mubr.f32.gmra.mxu0 %v278
    %v441 = vpop.f32.mrf.mxu0
    %v442 = vadd.f32 %v368, %v441
    %v443 = vpop.f32.mrf.mxu0
    %444 = vdwg.mxu0
    %v445 = vxor.u32 %v437, 2147483648
    %v446 = vxor.u32 %v442, 2147483648
    %v447 = vmul.f32 %v445, 1.442695
    %v448 = vpow.pop %v447
    %v449 = vmul.f32 %v446, 1.442695
    %v450 = vpow.pop %v449
    %v451 = vadd.f32 %v448, 1.0
    %v452 = vadd.f32 %v450, 1.0
    %v453 = vrcp.pop %v451
    %v454 = vmul.f32 1.0, %v453
    %v455 = vrcp.pop %v452
    %v456 = vmul.f32 1.0, %v455
    %v457 = vmul.f32 %v454, %v355
    %v458 = vmul.f32 %v456, %v356
    %v459 = vsub.f32 1.0, %v454
    %v460 = vsub.f32 1.0, %v456
    %v461 = vmul.f32 %v459, %v258
    %v462 = vmul.f32 %v460, %v259
    %v463 = vadd.f32 %v457, %v461
    %v464 = vadd.f32 %v458, %v462
    %v465 = vld [vmem:[%s7] sm:$0xff]
    %v466 = vld [vmem:[%s7 + $0x8] sm:$0xff]
    %v467 = vld [vmem:[%s7 + $0x10] sm:$0xff]
    %v468 = vld [vmem:[%s7 + $0x18] sm:$0xff]
    %v469 = vld [vmem:[%s7 + $0x20] sm:$0xff]
    %v470 = vld [vmem:[%s7 + $0x28] sm:$0xff]
    %v472 = vsel %vm273, %v463, 0
    %v475 = vsel %vm273, %v464, 0
    %477 = vmatprep.subr.mxu0 0.0
    %478 = vmatpush1.msra.mxu0 0.0
    %479 = vmatprep.subr.mxu0 0.0
    %480 = vmatpush1.msra.mxu0 0.0
    %481 = vmatprep.subr.mxu0 0.0
    %482 = vmatpush1.msra.mxu0 0.0
    %483 = vmatprep.subr.mxu0 0.0
    %484 = vmatpush1.msra.mxu0 0.0
    %485 = vmatprep.subr.mxu0 0.0
    %486 = vmatpush1.msra.mxu0 0.0
    %487 = vmatprep.subr.mxu0 0.0
    %488 = vmatpush1.msra.mxu0 0.0
    %489 = vmatprep.subr.mxu0 0.0
    %490 = vmatpush1.msra.mxu0 0.0
    %491 = vmatprep.subr.mxu0 0.0
    %492 = vmatpush1.msra.mxu0 0.0
    %493 = vmatprep.subr.mxu0 0.0
    %494 = vmatpush1.msra.mxu0 0.0
    %495 = vmatprep.subr.mxu0 0.0
    %496 = vmatpush1.msra.mxu0 0.0
    %497 = vmatprep.subr.mxu0 0.0
    %498 = vmatpush1.msra.mxu0 %v470
    %499 = vmatprep.subr.mxu0 0.0
    %500 = vmatpush1.msra.mxu0 %v469
    %501 = vmatprep.subr.mxu0 0.0
    %502 = vmatpush1.msra.mxu0 %v468
    %503 = vmatprep.subr.mxu0 0.0
    %504 = vmatpush1.msra.mxu0 %v467
    %505 = vmatprep.subr.mxu0 0.0
    %506 = vmatpush1.msra.mxu0 %v466
    %507 = vmatprep.subr.mxu0 0.0
    %508 = vmatpush1.msra.mxu0 %v465
    %509 = vmatprep.subr.mxu0 0.0
    %510 = vmatpush2.msra.mxu0 0.0
    %511 = vmatprep.subr.mxu0 0.0
    %512 = vmatpush2.msra.mxu0 0.0
    %513 = vmatprep.subr.mxu0 0.0
    %514 = vmatpush2.msra.mxu0 0.0
    %515 = vmatprep.subr.mxu0 0.0
    %516 = vmatpush2.msra.mxu0 0.0
    %517 = vmatprep.subr.mxu0 0.0
    %518 = vmatpush2.msra.mxu0 0.0
    %519 = vmatprep.subr.mxu0 0.0
    %520 = vmatpush2.msra.mxu0 0.0
    %521 = vmatprep.subr.mxu0 0.0
    %522 = vmatpush2.msra.mxu0 0.0
    %523 = vmatprep.subr.mxu0 0.0
    %524 = vmatpush2.msra.mxu0 0.0
    %525 = vmatprep.subr.mxu0 0.0
    %526 = vmatpush2.msra.mxu0 0.0
    %527 = vmatprep.subr.mxu0 0.0
    %528 = vmatpush2.msra.mxu0 0.0
    %529 = vmatprep.subr.mxu0 0.0
    %530 = vmatpush2.msra.mxu0 0.0
    %531 = vmatprep.subr.mxu0 0.0
    %532 = vmatpush2.msra.mxu0 0.0
    %533 = vmatprep.subr.mxu0 0.0
    %534 = vmatpush2.msra.mxu0 0.0
    %535 = vmatprep.subr.mxu0 0.0
    %536 = vmatpush2.msra.mxu0 0.0
    %537 = vmatprep.subr.mxu0 0.0
    %538 = vmatpush2.msra.mxu0 0.0
    %539 = vmatprep.subr.mxu0 0.0
    %540 = vmatpush2.msra.mxu0 0.0
    %541 = vmatprep.mubr.f32.mxu0 0.0
    %542 = vmatmul.mubr.f32.gmra.mxu0 %v472
    %v543 = vpop.f32.mrf.mxu0
    %v544 = vadd.f32 0.0, %v543
    %v545 = vpop.f32.mrf.mxu0
    %546 = vmatprep.mubr.f32.mxu0 0.0
    %547 = vmatmul.mubr.f32.gmra.mxu0 %v475
    %v548 = vpop.f32.mrf.mxu0
    %v549 = vadd.f32 0.0, %v548
    %v550 = vpop.f32.mrf.mxu0
    %551 = vdwg.mxu0
    %v552 = vld [vmem:[%s8] sm:$0xff]
    %v553 = vld [vmem:[%s8 + $0x8] sm:$0xff]
    %v555 = vsel %vm49, %v552, 0
    %v558 = vsel %vm49, %v553, 0
    %v561 = vsel %vm49, %v544, 0
    %v564 = vsel %vm49, %v549, 0
    %566 = vmatprep.subr.mxu0 0.0
    %567 = vmatpush1.xpose.msra.mxu0 0.0
    %568 = vmatprep.subr.mxu0 0.0
    %569 = vmatpush1.xpose.msra.mxu0 0.0
    %570 = vmatprep.subr.mxu0 0.0
    %571 = vmatpush1.xpose.msra.mxu0 0.0
    %572 = vmatprep.subr.mxu0 0.0
    %573 = vmatpush1.xpose.msra.mxu0 0.0
    %574 = vmatprep.subr.mxu0 0.0
    %575 = vmatpush1.xpose.msra.mxu0 0.0
    %576 = vmatprep.subr.mxu0 0.0
    %577 = vmatpush1.xpose.msra.mxu0 0.0
    %578 = vmatprep.subr.mxu0 0.0
    %579 = vmatpush1.xpose.msra.mxu0 0.0
    %580 = vmatprep.subr.mxu0 0.0
    %581 = vmatpush1.xpose.msra.mxu0 0.0
    %582 = vmatprep.subr.mxu0 0.0
    %583 = vmatpush1.xpose.msra.mxu0 0.0
    %584 = vmatprep.subr.mxu0 0.0
    %585 = vmatpush1.xpose.msra.mxu0 0.0
    %586 = vmatprep.subr.mxu0 0.0
    %587 = vmatpush1.xpose.msra.mxu0 0.0
    %588 = vmatprep.subr.mxu0 0.0
    %589 = vmatpush1.xpose.msra.mxu0 0.0
    %590 = vmatprep.subr.mxu0 0.0
    %591 = vmatpush1.xpose.msra.mxu0 0.0
    %592 = vmatprep.subr.mxu0 0.0
    %593 = vmatpush1.xpose.msra.mxu0 0.0
    %594 = vmatprep.subr.mxu0 0.0
    %595 = vmatpush1.xpose.msra.mxu0 %v564
    %596 = vmatprep.subr.mxu0 0.0
    %597 = vmatpush1.xpose.msra.mxu0 %v561
    %598 = vmatprep.subr.mxu0 0.0
    %599 = vmatpush2.xpose.msra.mxu0 0.0
    %600 = vmatprep.subr.mxu0 0.0
    %601 = vmatpush2.xpose.msra.mxu0 0.0
    %602 = vmatprep.subr.mxu0 0.0
    %603 = vmatpush2.xpose.msra.mxu0 0.0
    %604 = vmatprep.subr.mxu0 0.0
    %605 = vmatpush2.xpose.msra.mxu0 0.0
    %606 = vmatprep.subr.mxu0 0.0
    %607 = vmatpush2.xpose.msra.mxu0 0.0
    %608 = vmatprep.subr.mxu0 0.0
    %609 = vmatpush2.xpose.msra.mxu0 0.0
    %610 = vmatprep.subr.mxu0 0.0
    %611 = vmatpush2.xpose.msra.mxu0 0.0
    %612 = vmatprep.subr.mxu0 0.0
    %613 = vmatpush2.xpose.msra.mxu0 0.0
    %614 = vmatprep.subr.mxu0 0.0
    %615 = vmatpush2.xpose.msra.mxu0 0.0
    %616 = vmatprep.subr.mxu0 0.0
    %617 = vmatpush2.xpose.msra.mxu0 0.0
    %618 = vmatprep.subr.mxu0 0.0
    %619 = vmatpush2.xpose.msra.mxu0 0.0
    %620 = vmatprep.subr.mxu0 0.0
    %621 = vmatpush2.xpose.msra.mxu0 0.0
    %622 = vmatprep.subr.mxu0 0.0
    %623 = vmatpush2.xpose.msra.mxu0 0.0
    %624 = vmatprep.subr.mxu0 0.0
    %625 = vmatpush2.xpose.msra.mxu0 0.0
    %626 = vmatprep.subr.mxu0 0.0
    %627 = vmatpush2.xpose.msra.mxu0 0.0
    %628 = vmatprep.subr.mxu0 0.0
    %629 = vmatpush2.xpose.msra.mxu0 0.0
    %630 = vmatprep.mubr.f32.mxu0 0.0
    %631 = vmatmul.mubr.f32.gmra.mxu0 %v555
    %v632 = vpop.f32.mrf.mxu0
    %v633 = vadd.f32 0.0, %v632
    %v634 = vpop.f32.mrf.mxu0
    %635 = vmatprep.mubr.f32.mxu0 0.0
    %636 = vmatmul.mubr.f32.gmra.mxu0 %v558
    %v637 = vpop.f32.mrf.mxu0
    %v638 = vadd.f32 0.0, %v637
    %v639 = vpop.f32.mrf.mxu0
    %640 = vdwg.mxu0
    %vm641 = vcmask 130048
    %642 = vst.msk [vmem:[#allocation2] sm:$0xff] %vm641, %v633
    %643 = vst.msk [vmem:[#allocation2 + $0x8] sm:$0xff] %vm641, %v638
    // Predicated region
    $region38: #{tpu_custom_call.1} parent=1 // pred_check
      _
    $region39: #{tpu_custom_call.1} parent=1 // pred_check_branch
      %645 = sbr.rel (0) target = $region41
    $region40: #{tpu_custom_call.1} parent=1 // pred_region
      %s647 = ssub.s32 256, 256
      %648 = vsyncadd [#allocation3], %s647
      %s649 = sshll.u32 [#allocation2], 4
      %s650 = int_to_ptr.vmem [resolvable:$true] %s649
      %655 = dma.vmem_to_hbm [thread:$0]  %s650, 256, %s9, [#allocation3], 128, 128, 8
    $region41: #{tpu_custom_call.1} parent=1 // pred_fallthru
      _
    // Predicated region
    $region42: #{tpu_custom_call.1} parent=1 // pred_check
      _
    $region43: #{tpu_custom_call.1} parent=1 // pred_check_branch
      %657 = sbr.rel (0) target = $region45
    $region44: #{tpu_custom_call.1} parent=1 // pred_region
      %658 = dma.done [#allocation3], 256
    $region45: #{tpu_custom_call.1} parent=1 // pred_fallthru
      _
    %659 = vsyncpa [#allocation3], 1

</llo_original>
